<compile_context>
chip_gen: v7x
topology: tpu7x:2x2x1
jax: 0.10.0
libtpu: 0.0.40
codegen_flags: <defaults>
</compile_context>

<pallas_src>
import functools

import jax
import jax.numpy as jnp
import numpy as np
from jax.experimental import pallas as pl
from jax.experimental.pallas import tpu as pltpu


def _round_up(x, m):
    return ((x + m - 1) // m) * m


def _sage_layer_kernel(kmap_ref, cnt_ref, a_ref, xs_ref, xt_ref, ws_ref,
                       wa_ref, b_ref, o_ref, acc_ref, *, apply_relu):
    """One (row-block, k-step) tile of a fused SAGE layer.

    grid = (Tp//tm, max_nnz_blocks); axis 1 is the block-sparse neighbor
    reduction, kept last / 'arbitrary' so acc_ref stays VMEM-resident.
    """
    i = pl.program_id(0)
    j = pl.program_id(1)

    @pl.when(j == 0)
    def _init():
        acc_ref[...] = jnp.zeros_like(acc_ref)

    # Only the first cnt_ref[i] steps of this row block carry real edges;
    # padded steps re-fetch block 0 but contribute nothing.
    @pl.when(j < cnt_ref[i])
    def _accumulate():
        a = a_ref[...].astype(jnp.bfloat16)            # int8 -> bf16 (VPU)
        acc_ref[...] += jnp.dot(a, xs_ref[...],        # bf16 x bf16 on MXU
                                preferred_element_type=jnp.float32)

    @pl.when(j == pl.num_programs(1) - 1)
    def _epilogue():
        out = jnp.dot(xt_ref[...], ws_ref[...],
                      preferred_element_type=jnp.float32)
        out = out + jnp.dot(acc_ref[...].astype(jnp.bfloat16), wa_ref[...],
                            preferred_element_type=jnp.float32)
        out = out + b_ref[...]
        if apply_relu:             # static python flag -> no runtime branch
            out = jnp.maximum(out, 0.0)
        o_ref[...] = out.astype(o_ref.dtype)


def sage_layer_pallas(x_pad, num_sources, edge_src, edge_dst, num_targets,
                      w_self, w_aggr, bias, *, apply_relu, tm=None, tk=None,
                      interpret=False):
    """One fused SAGE layer.

    x_pad: (rows >= num_sources, Dp) bf16, feature-padded activations.
    Returns (Tp, Dp) bf16 padded activations; real values live in [:T, :D].
    """
    S = int(num_sources)
    T = int(num_targets)
    rows, Dp = x_pad.shape
    D = w_self.shape[0]

    # ---- tile sizes --------------------------------------------------------
    if tm is None:
        # >= 2 row blocks when T allows (v7x megacore), 32-granular so int8 A
        # / bf16 x tiles stay sublane-pack friendly, capped at 512 rows.
        tm = max(32, min(512, _round_up((T + 1) // 2, 32)))
        tm = min(tm, _round_up(T, 32))
    if tk is None:
        tk = max(128, min(2048, _round_up(S, 128)))
    Tp = _round_up(T, tm)
    Sp = _round_up(max(S, Tp, rows), tk)

    # ---- operand prep: single pass each, final dtype, padded shape ---------
    # NOTE: int8 adjacency is exact for edge multiplicities <= 127; sampled
    # sub-graphs are far below this (clamp/assert upstream for multigraphs).
    # TODO(synk): for very large graphs, build the block-CSR directly from the
    # edge list and DMA only non-empty A blocks instead of a dense (Tp, Sp) A.
    A_p = jnp.zeros((Tp, Sp), jnp.int8).at[edge_dst, edge_src].add(
        jnp.int8(1))
    if x_pad.shape[0] != Sp:
        x_pad = jnp.zeros((Sp, Dp), jnp.bfloat16).at[:rows].set(x_pad)
    ws_p = jnp.zeros((Dp, Dp), jnp.bfloat16).at[:D, :D].set(
        w_self.astype(jnp.bfloat16))
    wa_p = jnp.zeros((Dp, Dp), jnp.bfloat16).at[:D, :D].set(
        w_aggr.astype(jnp.bfloat16))
    b_p = jnp.zeros((1, Dp), jnp.float32).at[0, :D].set(
        bias.astype(jnp.float32))

    # ---- block-CSR over A (host-side metadata, scalar-prefetched) ----------
    nb_rows, nb_cols = Tp // tm, Sp // tk
    dst_np = np.asarray(edge_dst)
    src_np = np.asarray(edge_src)
    occ = np.zeros((nb_rows, nb_cols), dtype=bool)
    if dst_np.size:
        occ[dst_np // tm, src_np // tk] = True
    counts = occ.sum(axis=1).astype(np.int32)
    max_steps = max(int(counts.max()) if counts.size else 0, 1)
    kmap = np.zeros((nb_rows, max_steps), dtype=np.int32)
    for r in range(nb_rows):
        nz = np.flatnonzero(occ[r])
        kmap[r, :nz.size] = nz
    kmap_flat = jnp.asarray(kmap.reshape(-1))   # 1D -> cheap SMEM layout
    counts_j = jnp.asarray(counts)

    # ---- index maps (scalar-prefetch refs are trailing positional args) ----
    def a_map(i, j, kmap_r, cnt_r):
        return (i, kmap_r[i * max_steps + j])

    def xs_map(i, j, kmap_r, cnt_r):
        return (kmap_r[i * max_steps + j], 0)

    def row_map(i, j, kmap_r, cnt_r):
        return (i, 0)

    def const_map(i, j, kmap_r, cnt_r):
        return (0, 0)

    # ---- explicit VMEM budget (double-buffered streams + residents) --------
    vmem_bytes = (2 * tm * tk * 1            # A tiles, int8
                  + 2 * tk * Dp * 2          # x source tiles, bf16
                  + 2 * tm * Dp * 2          # x target tiles, bf16
                  + 2 * tm * Dp * 2          # output tiles, bf16
                  + tm * Dp * 4              # f32 accumulator scratch
                  + 2 * 2 * Dp * Dp * 2      # W_self + W_aggr, bf16
                  + 2 * Dp * 4)              # bias
    vmem_limit = int(min(max(2 * vmem_bytes + (4 << 20), 16 << 20), 48 << 20))

    kernel = functools.partial(_sage_layer_kernel, apply_relu=apply_relu)

    out_p = pl.pallas_call(
        kernel,
        out_shape=jax.ShapeDtypeStruct((Tp, Dp), jnp.bfloat16),
        grid_spec=pltpu.PrefetchScalarGridSpec(
            num_scalar_prefetch=2,
            grid=(nb_rows, max_steps),
            in_specs=[
                # TODO(synk): add pipeline_mode=pl.Buffered(3) here if
                # profiling shows exposed A DMA at the chosen tile size.
                pl.BlockSpec((tm, tk), a_map),      # A tile (streamed, int8)
                pl.BlockSpec((tk, Dp), xs_map),     # x source tile (bf16)
                pl.BlockSpec((tm, Dp), row_map),    # x target tile (bf16)
                pl.BlockSpec((Dp, Dp), const_map),  # W_self (VMEM resident)
                pl.BlockSpec((Dp, Dp), const_map),  # W_aggr (VMEM resident)
                pl.BlockSpec((1, Dp), const_map),   # bias (VMEM resident)
            ],
            out_specs=pl.BlockSpec((tm, Dp), row_map),
            scratch_shapes=[pltpu.VMEM((tm, Dp), jnp.float32)],
        ),
        compiler_params=pltpu.CompilerParams(
            dimension_semantics=("parallel", "arbitrary"),
            vmem_limit_bytes=vmem_limit),
        interpret=interpret,
    )(kmap_flat, counts_j, A_p, x_pad, x_pad, ws_p, wa_p, b_p)

    return out_p


def fastsage_forward(x, adjs, layer_params, *, interpret=False):
    """JAX/Pallas equivalent of FastSAGETorch.forward.

    adjs: list of (edge_src, edge_dst, (num_src, num_dst)) per layer
          (PyG NeighborSampler convention: the targets are the first num_dst
          rows of the source node set).
    layer_params: list of (w_self, w_aggr, bias); torch's Linear(2D, D)
          weight split column-wise: w_self = W[:, :D].T, w_aggr = W[:, D:].T.
    """
    num_layers = len(adjs)
    S, D = x.shape
    Dp = _round_up(D, 128)
    # Activations stay padded + bf16 across layers; sliced back once at the end.
    x_pad = jnp.zeros((S, Dp), jnp.bfloat16).at[:, :D].set(
        x.astype(jnp.bfloat16))
    for i, (edge_src, edge_dst, size) in enumerate(adjs):
        w_self, w_aggr, bias = layer_params[i]
        T = int(size[1])
        x_pad = sage_layer_pallas(
            x_pad, S, edge_src, edge_dst, T, w_self, w_aggr, bias,
            apply_relu=(i != num_layers - 1), interpret=interpret)
        S = T
    return x_pad[:S, :D].astype(jnp.float32)


def fastsage_forward_ref(x, adjs, layer_params):
    """Pure-JAX f32 reference (mirrors the PyTorch scatter + Linear(cat))."""
    num_layers = len(adjs)
    for i, (edge_src, edge_dst, size) in enumerate(adjs):
        w_self, w_aggr, bias = layer_params[i]
        T = size[1]
        target = x[:T]
        aggr = jnp.zeros((T, x.shape[1]), x.dtype).at[edge_dst].add(x[edge_src])
        x = target @ w_self + aggr @ w_aggr + bias
        if i != num_layers - 1:
            x = jnp.maximum(x, 0.0)
    return x


if __name__ == "__main__":
    key = jax.random.PRNGKey(0)
    D = 64            # latent_dim ("recdim")
    num_layers = 2
    # Sampled sub-graph node counts per hop (sources include the targets).
    N = [50, 20, 8]   # layer-0 sources, layer-0 targets / layer-1 sources, batch
    E = [96, 40]      # edges per layer

    keys = jax.random.split(key, 16)
    x = jax.random.normal(keys[0], (N[0], D), jnp.float32)

    adjs = []
    for i in range(num_layers):
        src = jax.random.randint(keys[1 + 2 * i], (E[i],), 0, N[i])
        dst = jax.random.randint(keys[2 + 2 * i], (E[i],), 0, N[i + 1])
        adjs.append((src, dst, (N[i], N[i + 1])))

    layer_params = []
    for i in range(num_layers):
        kw = jax.random.split(keys[8 + i], 3)
        scale = 1.0 / np.sqrt(2 * D)
        w_self = jax.random.normal(kw[0], (D, D), jnp.float32) * scale
        w_aggr = jax.random.normal(kw[1], (D, D), jnp.float32) * scale
        bias = jax.random.normal(kw[2], (D,), jnp.float32) * 0.1
        layer_params.append((w_self, w_aggr, bias))

    out = jax.block_until_ready(fastsage_forward(x, adjs, layer_params))
    ref = jax.block_until_ready(fastsage_forward_ref(x, adjs, layer_params))

    assert out.shape == (N[-1], D)
    # Kernel runs bf16 activations/weights end-to-end (f32 accumulation), so
    # compare against the f32 reference with a bf16-appropriate tolerance.
    np.testing.assert_allclose(np.asarray(out), np.asarray(ref),
                               rtol=5e-2, atol=5e-2)
    print("KERNEL_OK")
</pallas_src>

<mosaic_0001>
module attributes {stable_mosaic.version = 11 : i64} {
  func.func @_sage_layer_kernel(%arg0: i32, %arg1: i32, %arg2: memref<1xi32, #tpu.memory_space<smem>>, %arg3: memref<1xi32, #tpu.memory_space<smem>>, %arg4: memref<32x128xi8, #tpu.memory_space<vmem>>, %arg5: memref<128x128xbf16, #tpu.memory_space<vmem>>, %arg6: memref<32x128xbf16, #tpu.memory_space<vmem>>, %arg7: memref<128x128xbf16, #tpu.memory_space<vmem>>, %arg8: memref<128x128xbf16, #tpu.memory_space<vmem>>, %arg9: memref<1x128xf32, #tpu.memory_space<vmem>>, %arg10: memref<32x128xbf16, #tpu.memory_space<vmem>>, %arg11: memref<32x128xf32, #tpu.memory_space<vmem>>) attributes {dimension_semantics = [#tpu.dimension_semantics<parallel>, #tpu.dimension_semantics<arbitrary>], iteration_bounds = array<i64: 1, 1>, scalar_prefetch = 2 : i64, scratch_operands = 1 : i64, tpu.core_type = #tpu.core_type<tc>, window_params = [{transform_indices = @transform_0, window_bounds = array<i64: 32, 128>}, {transform_indices = @transform_1, window_bounds = array<i64: 128, 128>}, {transform_indices = @transform_2, window_bounds = array<i64: 32, 128>}, {pipeline_mode = #tpu.pipeline_mode<synchronous>, transform_indices = @transform_3, window_bounds = array<i64: 128, 128>}, {pipeline_mode = #tpu.pipeline_mode<synchronous>, transform_indices = @transform_4, window_bounds = array<i64: 128, 128>}, {pipeline_mode = #tpu.pipeline_mode<synchronous>, transform_indices = @transform_5, window_bounds = array<i64: 1, 128>}, {transform_indices = @transform_6, window_bounds = array<i64: 32, 128>}]} {
    %c0_i32 = arith.constant 0 : i32
    %0 = arith.cmpi eq, %arg1, %c0_i32 : i32
    %1 = arith.extui %0 : i1 to i32
    %c0_i32_0 = arith.constant 0 : i32
    %2 = arith.cmpi ne, %1, %c0_i32_0 : i32
    scf.if %2 {
      %cst = arith.constant 0.000000e+00 : f32
      %11 = vector.broadcast %cst : f32 to vector<32x128xf32>
      %c0 = arith.constant 0 : index
      %c0_4 = arith.constant 0 : index
      %12 = vector.load %arg11[%c0, %c0_4] : memref<32x128xf32, #tpu.memory_space<vmem>>, vector<32x128xf32>
      tpu.vector_store %arg11[%c0, %c0_4], %11 {strides = array<i32>} : memref<32x128xf32, #tpu.memory_space<vmem>>, vector<32x128xf32>,
    } else {
    }
    %3 = arith.index_cast %arg0 : i32 to index
    %4 = memref.load %arg3[%3] : memref<1xi32, #tpu.memory_space<smem>>
    %5 = arith.cmpi slt, %arg1, %4 : i32
    %6 = arith.extui %5 : i1 to i32
    %c0_i32_1 = arith.constant 0 : i32
    %7 = arith.cmpi ne, %6, %c0_i32_1 : i32
    scf.if %7 {
      %c0 = arith.constant 0 : index
      %c0_4 = arith.constant 0 : index
      %11 = vector.load %arg4[%c0, %c0_4] : memref<32x128xi8, #tpu.memory_space<vmem>>, vector<32x128xi8>
      %12 = arith.sitofp %11 : vector<32x128xi8> to vector<32x128xbf16>
      %c0_5 = arith.constant 0 : index
      %c0_6 = arith.constant 0 : index
      %13 = vector.load %arg11[%c0_5, %c0_6] : memref<32x128xf32, #tpu.memory_space<vmem>>, vector<32x128xf32>
      %c0_7 = arith.constant 0 : index
      %c0_8 = arith.constant 0 : index
      %14 = vector.load %arg5[%c0_7, %c0_8] : memref<128x128xbf16, #tpu.memory_space<vmem>>, vector<128x128xbf16>
      %cst = arith.constant dense<0.000000e+00> : vector<32x128xf32>
      %15 = tpu.matmul %12, %14, %cst {dimension_numbers = #tpu.dot_dimension_numbers<[1], [0], [0], [1], [0, 0, 1, 1], [], []>} : vector<32x128xbf16>, vector<128x128xbf16>, vector<32x128xf32> -> vector<32x128xf32>
      %16 = arith.addf %13, %15 : vector<32x128xf32>
      %c0_9 = arith.constant 0 : index
      %c0_10 = arith.constant 0 : index
      %17 = vector.load %arg11[%c0_9, %c0_10] : memref<32x128xf32, #tpu.memory_space<vmem>>, vector<32x128xf32>
      tpu.vector_store %arg11[%c0_9, %c0_10], %16 {strides = array<i32>} : memref<32x128xf32, #tpu.memory_space<vmem>>, vector<32x128xf32>,
    } else {
    }
    %c0_i32_2 = arith.constant 0 : i32
    %8 = arith.cmpi eq, %arg1, %c0_i32_2 : i32
    %9 = arith.extui %8 : i1 to i32
    %c0_i32_3 = arith.constant 0 : i32
    %10 = arith.cmpi ne, %9, %c0_i32_3 : i32
    scf.if %10 {
      %c0 = arith.constant 0 : index
      %c0_4 = arith.constant 0 : index
      %11 = vector.load %arg6[%c0, %c0_4] : memref<32x128xbf16, #tpu.memory_space<vmem>>, vector<32x128xbf16>
      %c0_5 = arith.constant 0 : index
      %c0_6 = arith.constant 0 : index
      %12 = vector.load %arg7[%c0_5, %c0_6] : memref<128x128xbf16, #tpu.memory_space<vmem>>, vector<128x128xbf16>
      %cst = arith.constant dense<0.000000e+00> : vector<32x128xf32>
      %13 = tpu.matmul %11, %12, %cst {dimension_numbers = #tpu.dot_dimension_numbers<[1], [0], [0], [1], [0, 0, 1, 1], [], []>} : vector<32x128xbf16>, vector<128x128xbf16>, vector<32x128xf32> -> vector<32x128xf32>
      %c0_7 = arith.constant 0 : index
      %c0_8 = arith.constant 0 : index
      %14 = vector.load %arg11[%c0_7, %c0_8] : memref<32x128xf32, #tpu.memory_space<vmem>>, vector<32x128xf32>
      %15 = arith.truncf %14 : vector<32x128xf32> to vector<32x128xbf16>
      %c0_9 = arith.constant 0 : index
      %c0_10 = arith.constant 0 : index
      %16 = vector.load %arg8[%c0_9, %c0_10] : memref<128x128xbf16, #tpu.memory_space<vmem>>, vector<128x128xbf16>
      %cst_11 = arith.constant dense<0.000000e+00> : vector<32x128xf32>
      %17 = tpu.matmul %15, %16, %cst_11 {dimension_numbers = #tpu.dot_dimension_numbers<[1], [0], [0], [1], [0, 0, 1, 1], [], []>} : vector<32x128xbf16>, vector<128x128xbf16>, vector<32x128xf32> -> vector<32x128xf32>
      %18 = arith.addf %13, %17 : vector<32x128xf32>
      %c0_12 = arith.constant 0 : index
      %c0_13 = arith.constant 0 : index
      %19 = vector.load %arg9[%c0_12, %c0_13] : memref<1x128xf32, #tpu.memory_space<vmem>>, vector<1x128xf32>
      %20 = vector.broadcast %19 : vector<1x128xf32> to vector<32x128xf32>
      %21 = arith.addf %18, %20 : vector<32x128xf32>
      %cst_14 = arith.constant 0.000000e+00 : f32
      %22 = vector.broadcast %cst_14 : f32 to vector<32x128xf32>
      %23 = arith.maximumf %21, %22 : vector<32x128xf32>
      %24 = arith.truncf %23 : vector<32x128xf32> to vector<32x128xbf16>
      %c0_15 = arith.constant 0 : index
      %c0_16 = arith.constant 0 : index
      %25 = vector.load %arg10[%c0_15, %c0_16] : memref<32x128xbf16, #tpu.memory_space<vmem>>, vector<32x128xbf16>
      tpu.vector_store %arg10[%c0_15, %c0_16], %24 {strides = array<i32>} : memref<32x128xbf16, #tpu.memory_space<vmem>>, vector<32x128xbf16>,
    } else {
    }
    return
  }
  func.func @transform_0(%arg0: i32, %arg1: i32, %arg2: memref<1xi32, #tpu.memory_space<smem>>, %arg3: memref<1xi32, #tpu.memory_space<smem>>) -> (i32, i32) {
    %c1_i32 = arith.constant 1 : i32
    %0 = arith.muli %arg0, %c1_i32 : i32
    %1 = arith.addi %0, %arg1 : i32
    %2 = arith.index_cast %1 : i32 to index
    %3 = memref.load %arg2[%2] : memref<1xi32, #tpu.memory_space<smem>>
    %c0_i32 = arith.constant 0 : i32
    return %arg0, %3 : i32, i32
  }
  func.func @transform_1(%arg0: i32, %arg1: i32, %arg2: memref<1xi32, #tpu.memory_space<smem>>, %arg3: memref<1xi32, #tpu.memory_space<smem>>) -> (i32, i32) {
    %c1_i32 = arith.constant 1 : i32
    %0 = arith.muli %arg0, %c1_i32 : i32
    %1 = arith.addi %0, %arg1 : i32
    %2 = arith.index_cast %1 : i32 to index
    %3 = memref.load %arg2[%2] : memref<1xi32, #tpu.memory_space<smem>>
    %c0_i32 = arith.constant 0 : i32
    %c0_i32_0 = arith.constant 0 : i32
    return %3, %c0_i32 : i32, i32
  }
  func.func @transform_2(%arg0: i32, %arg1: i32, %arg2: memref<1xi32, #tpu.memory_space<smem>>, %arg3: memref<1xi32, #tpu.memory_space<smem>>) -> (i32, i32) {
    %c0_i32 = arith.constant 0 : i32
    %c0_i32_0 = arith.constant 0 : i32
    return %arg0, %c0_i32 : i32, i32
  }
  func.func @transform_3(%arg0: i32, %arg1: i32, %arg2: memref<1xi32, #tpu.memory_space<smem>>, %arg3: memref<1xi32, #tpu.memory_space<smem>>) -> (i32, i32) {
    %c0_i32 = arith.constant 0 : i32
    %c0_i32_0 = arith.constant 0 : i32
    %c0_i32_1 = arith.constant 0 : i32
    return %c0_i32, %c0_i32_0 : i32, i32
  }
  func.func @transform_4(%arg0: i32, %arg1: i32, %arg2: memref<1xi32, #tpu.memory_space<smem>>, %arg3: memref<1xi32, #tpu.memory_space<smem>>) -> (i32, i32) {
    %c0_i32 = arith.constant 0 : i32
    %c0_i32_0 = arith.constant 0 : i32
    %c0_i32_1 = arith.constant 0 : i32
    return %c0_i32, %c0_i32_0 : i32, i32
  }
  func.func @transform_5(%arg0: i32, %arg1: i32, %arg2: memref<1xi32, #tpu.memory_space<smem>>, %arg3: memref<1xi32, #tpu.memory_space<smem>>) -> (i32, i32) {
    %c0_i32 = arith.constant 0 : i32
    %c0_i32_0 = arith.constant 0 : i32
    %c0_i32_1 = arith.constant 0 : i32
    return %c0_i32, %c0_i32_0 : i32, i32
  }
  func.func @transform_6(%arg0: i32, %arg1: i32, %arg2: memref<1xi32, #tpu.memory_space<smem>>, %arg3: memref<1xi32, #tpu.memory_space<smem>>) -> (i32, i32) {
    %c0_i32 = arith.constant 0 : i32
    %c0_i32_0 = arith.constant 0 : i32
    return %arg0, %c0_i32 : i32, i32
  }
}

</mosaic_0001>

<llo_original>
// kernel: tpu_custom_call.1
$region0: #{tpu_custom_call.1}
  #allocation0 [shape = 'u32[]', space=smem, size = 0x4, offset = 0x4, fixed_abs, tag = 'smem constant byte address 0x4 - core index']
  #allocation1 [shape = 'u32[144,128]{1,0:T(1,128)}', space=vmem, size = 0x12000, scoped, tag = 'internal scratch']
  #allocation2 [shape = 'f32[32,128]{1,0:T(8,128)}', space=vmem, size = 0x4000, scoped, tag = 'scratch operand']
  #allocation3 [shape = 's32[1]{0}', space=sflag, size = 0x4, scoped, tag = 'scoped memory for tpu_custom_call.1']
  #allocation4 [shape = 's32[1]{0:T(128)S(6)}', space=smem, size = 0x200, scoped, tag = 'prefetched SMEM operand 0']
  #allocation5 [shape = 's32[1]{0:T(128)S(6)}', space=smem, size = 0x200, scoped, tag = 'prefetched SMEM operand 1']
  %s0 = inlined_call_operand.<no memory space> [shape: s32[1], index: 0, kind: input, shape index: {}]
  %s1 = inlined_call_operand.<no memory space> [shape: s32[1], index: 1, kind: input, shape index: {}]
  %s2 = inlined_call_operand.hbm [shape: s8[32,128], index: 2, kind: input, shape index: {}]
  %s3 = inlined_call_operand.hbm [shape: bf16[128,128], index: 3, kind: input, shape index: {}]
  %s4 = inlined_call_operand.hbm [shape: bf16[128,128], index: 4, kind: input, shape index: {}]
  %s5 = inlined_call_operand.hbm [shape: bf16[128,128], index: 5, kind: input, shape index: {}]
  %s6 = inlined_call_operand.hbm [shape: bf16[128,128], index: 6, kind: input, shape index: {}]
  %s7 = inlined_call_operand.vmem [shape: f32[1,128], index: 7, kind: input, shape index: {}]
  %s8 = inlined_call_operand.hbm [shape: bf16[32,128], index: 8, kind: output, shape index: {}]
  %s9 = sld [smem:[#allocation0]]
  $region66: #{tpu_custom_call.1} parent=0
    _
  %s11 = ssub.s32 1, %s9
  %s12 = scalar_select 0, %s11, %s9
  %13 = sst [smem:[#allocation4]] %s0
  %14 = sst [smem:[#allocation5]] %s1
  $region1: #{tpu_custom_call.1} parent=0
    #allocation6 [shape = 'u8[4096]{0}', space=vmem, size = 0x1000, scoped, tag = 'input window, operand 2, single buffered']
    #allocation7 [shape = 's32[1]{0}', space=sflag, size = 0x4, scoped, tag = 'scoped memory for tpu_custom_call.1']
    #allocation8 [shape = 's32[1]{0}', space=sflag, size = 0x4, scoped, tag = 'scoped memory for tpu_custom_call.1']
    #allocation9 [shape = 'u8[32768]{0}', space=vmem, size = 0x8000, scoped, tag = 'input window, operand 3, single buffered']
    #allocation10 [shape = 's32[1]{0}', space=sflag, size = 0x4, scoped, tag = 'scoped memory for tpu_custom_call.1']
    #allocation11 [shape = 'u8[8192]{0}', space=vmem, size = 0x2000, scoped, tag = 'input window, operand 4, single buffered']
    #allocation12 [shape = 'u8[32768]{0}', space=vmem, size = 0x8000, scoped, tag = 'input window, operand 5, single buffered']
    #allocation13 [shape = 's32[1]{0}', space=sflag, size = 0x4, scoped, tag = 'scoped memory for tpu_custom_call.1']
    #allocation14 [shape = 'u8[32768]{0}', space=vmem, size = 0x8000, scoped, tag = 'input window, operand 6, single buffered']
    #allocation15 [shape = 'u8[8192]{0}', space=vmem, size = 0x2000, scoped, tag = 'output window, operand 0, single buffered']
    %15 = vsyncpa [#allocation7], 0
    %16 = vsyncpa [#allocation10], 0
    %17 = vsyncpa [#allocation13], 0
    %18 = vsyncpa [#allocation8], 0
    // Predicated region
    $region2: #{tpu_custom_call.1} parent=1 // pred_check
      _
    $region3: #{tpu_custom_call.1} parent=1 // pred_check_branch
      %20 = sbr.rel (0) target = $region5
    $region4: #{tpu_custom_call.1} parent=1 // pred_region
      %s21 = sadd.s32 0, 0
      %s22 = sld [smem:[#allocation4 + %s21]]
      %s24 = ssub.s32 128, 128
      %25 = vsyncadd [#allocation7], %s24
      %s26 = smul.addr %s22, 128
      %s27 = scalar_lea.hbm %s2, %s26
      %s29 = sshll.u32 [#allocation6], 4
      %s30 = int_to_ptr.vmem [resolvable:$true] %s29
      %32 = dma.hbm_to_vmem [thread:$0]  %s27, 128, %s30, [#allocation7]
    $region5: #{tpu_custom_call.1} parent=1 // pred_fallthru
      _
    // Predicated region
    $region6: #{tpu_custom_call.1} parent=1 // pred_check
      _
    $region7: #{tpu_custom_call.1} parent=1 // pred_check_branch
      %34 = sbr.rel (0) target = $region9
    $region8: #{tpu_custom_call.1} parent=1 // pred_region
      %s35 = sadd.s32 0, 0
      %s36 = sld [smem:[#allocation4 + %s35]]
      %s37 = smul.u32 16, %s36
      %s39 = ssub.s32 1024, 1024
      %40 = vsyncadd [#allocation10], %s39
      %s41 = smul.addr %s37, 64
      %s42 = scalar_lea.hbm %s3, %s41
      %s43 = sshll.u32 [#allocation9], 4
      %s44 = int_to_ptr.vmem [resolvable:$true] %s43
      %49 = dma.hbm_to_vmem [thread:$0]  %s42, 1024, %s44, [#allocation10], 64, 64, 4
    $region9: #{tpu_custom_call.1} parent=1 // pred_fallthru
      _
    // Predicated region
    $region10: #{tpu_custom_call.1} parent=1 // pred_check
      _
    $region11: #{tpu_custom_call.1} parent=1 // pred_check_branch
      %51 = sbr.rel (0) target = $region13
    $region12: #{tpu_custom_call.1} parent=1 // pred_region
      %s53 = ssub.s32 256, 256
      %54 = vsyncadd [#allocation10], %s53
      %s55 = sshll.u32 [#allocation11], 4
      %s56 = int_to_ptr.vmem [resolvable:$true] %s55
      %61 = dma.hbm_to_vmem [thread:$0]  %s4, 256, %s56, [#allocation10], 64, 64, 4
    $region13: #{tpu_custom_call.1} parent=1 // pred_fallthru
      _
    // Predicated region
    $region14: #{tpu_custom_call.1} parent=1 // pred_check
      _
    $region15: #{tpu_custom_call.1} parent=1 // pred_check_branch
      %63 = sbr.rel (0) target = $region17
    $region16: #{tpu_custom_call.1} parent=1 // pred_region
      %s65 = ssub.s32 1024, 1024
      %66 = vsyncadd [#allocation13], %s65
      %s67 = sshll.u32 [#allocation12], 4
      %s68 = int_to_ptr.vmem [resolvable:$true] %s67
      %73 = dma.hbm_to_vmem [thread:$0]  %s5, 1024, %s68, [#allocation13], 64, 64, 4
    $region17: #{tpu_custom_call.1} parent=1 // pred_fallthru
      _
    // Predicated region
    $region18: #{tpu_custom_call.1} parent=1 // pred_check
      _
    $region19: #{tpu_custom_call.1} parent=1 // pred_check_branch
      %75 = sbr.rel (0) target = $region21
    $region20: #{tpu_custom_call.1} parent=1 // pred_region
      %s77 = ssub.s32 1024, 1024
      %78 = vsyncadd [#allocation13], %s77
      %s79 = sshll.u32 [#allocation14], 4
      %s80 = int_to_ptr.vmem [resolvable:$true] %s79
      %85 = dma.hbm_to_vmem [thread:$0]  %s6, 1024, %s80, [#allocation13], 64, 64, 4
    $region21: #{tpu_custom_call.1} parent=1 // pred_fallthru
      _
    // Predicated region
    $region22: #{tpu_custom_call.1} parent=1 // pred_check
      _
    $region23: #{tpu_custom_call.1} parent=1 // pred_check_branch
      %87 = sbr.rel (0) target = $region25
    $region24: #{tpu_custom_call.1} parent=1 // pred_region
      _
    $region25: #{tpu_custom_call.1} parent=1 // pred_fallthru
      _
    // Predicated region
    $region26: #{tpu_custom_call.1} parent=1 // pred_check
      _
    $region27: #{tpu_custom_call.1} parent=1 // pred_check_branch
      %89 = sbr.rel (0) target = $region29
    $region28: #{tpu_custom_call.1} parent=1 // pred_region
      %90 = dma.done [#allocation7], 128
    $region29: #{tpu_custom_call.1} parent=1 // pred_fallthru
      _
    // Predicated region
    $region30: #{tpu_custom_call.1} parent=1 // pred_check
      _
    $region31: #{tpu_custom_call.1} parent=1 // pred_check_branch
      %92 = sbr.rel (0) target = $region33
    $region32: #{tpu_custom_call.1} parent=1 // pred_region
      %93 = dma.done [#allocation10], 1024
    $region33: #{tpu_custom_call.1} parent=1 // pred_fallthru
      _
    // Predicated region
    $region34: #{tpu_custom_call.1} parent=1 // pred_check
      _
    $region35: #{tpu_custom_call.1} parent=1 // pred_check_branch
      %95 = sbr.rel (0) target = $region37
    $region36: #{tpu_custom_call.1} parent=1 // pred_region
      %96 = dma.done [#allocation10], 256
    $region37: #{tpu_custom_call.1} parent=1 // pred_fallthru
      _
    // Predicated region
    $region38: #{tpu_custom_call.1} parent=1 // pred_check
      _
    $region39: #{tpu_custom_call.1} parent=1 // pred_check_branch
      %98 = sbr.rel (0) target = $region41
    $region40: #{tpu_custom_call.1} parent=1 // pred_region
      %99 = dma.done [#allocation13], 1024
    $region41: #{tpu_custom_call.1} parent=1 // pred_fallthru
      _
    // Predicated region
    $region42: #{tpu_custom_call.1} parent=1 // pred_check
      _
    $region43: #{tpu_custom_call.1} parent=1 // pred_check_branch
      %101 = sbr.rel (0) target = $region45
    $region44: #{tpu_custom_call.1} parent=1 // pred_region
      %102 = dma.done [#allocation13], 1024
    $region45: #{tpu_custom_call.1} parent=1 // pred_fallthru
      _
    %s103 = sadd.s32 0, 0
    %s104 = sld [smem:[#allocation4 + %s103]]
    %s105 = sadd.s32 0, 0
    %s106 = sld [smem:[#allocation4 + %s105]]
    %s107 = smul.u32 16, %s106
    %p109 = scmp.eq.s32.totalorder 0, 0
    // Predicated region
    $region46: #{tpu_custom_call.1} parent=1 // pred_check
      %p110 = pneg %p109
    $region47: #{tpu_custom_call.1} parent=1 // pred_check_branch
      %112 = sbr.rel (%p110) target = $region49
    $region48: #{tpu_custom_call.1} parent=1 // pred_region
      %113 = vst [vmem:[#allocation2] sm:$0xff] 0.0
      %114 = vst [vmem:[#allocation2 + $0x8] sm:$0xff] 0.0
      %115 = vst [vmem:[#allocation2 + $0x10] sm:$0xff] 0.0
      %116 = vst [vmem:[#allocation2 + $0x18] sm:$0xff] 0.0
    $region49: #{tpu_custom_call.1} parent=1 // pred_fallthru
      _
    %s117 = sld [smem:[#allocation5]]
    %p118 = scmp.lt.s32.totalorder 0, %s117
    // Predicated region
    $region50: #{tpu_custom_call.1} parent=1 // pred_check
      %p119 = pneg %p118
    $region51: #{tpu_custom_call.1} parent=1 // pred_check_branch
      %121 = sbr.rel (%p119) target = $region53
    $region52: #{tpu_custom_call.1} parent=1 // pred_region
      %v122 = vld [vmem:[#allocation6] sm:$0xff]
      %v123 = vunpack.c.l.s8.bf16 %v122
      %v124 = vunpack.c.h.s8.bf16 %v122
      %v125 = vld [vmem:[#allocation2] sm:$0xff]
      %v126 = vld [vmem:[#allocation2 + $0x8] sm:$0xff]
      %v127 = vld [vmem:[#allocation2 + $0x10] sm:$0xff]
      %v128 = vld [vmem:[#allocation2 + $0x18] sm:$0xff]
      %v129 = vld [vmem:[#allocation9] sm:$0xf]
      %v130 = vld [vmem:[#allocation9 + $0x4] sm:$0xf]
      %v131 = vld [vmem:[#allocation9 + $0x8] sm:$0xf]
      %v132 = vld [vmem:[#allocation9 + $0xc] sm:$0xf]
      %v133 = vld [vmem:[#allocation9 + $0x10] sm:$0xf]
      %v134 = vld [vmem:[#allocation9 + $0x14] sm:$0xf]
      %v135 = vld [vmem:[#allocation9 + $0x18] sm:$0xf]
      %v136 = vld [vmem:[#allocation9 + $0x1c] sm:$0xf]
      %v137 = vld [vmem:[#allocation9 + $0x20] sm:$0xf]
      %v138 = vld [vmem:[#allocation9 + $0x24] sm:$0xf]
      %v139 = vld [vmem:[#allocation9 + $0x28] sm:$0xf]
      %v140 = vld [vmem:[#allocation9 + $0x2c] sm:$0xf]
      %v141 = vld [vmem:[#allocation9 + $0x30] sm:$0xf]
      %v142 = vld [vmem:[#allocation9 + $0x34] sm:$0xf]
      %v143 = vld [vmem:[#allocation9 + $0x38] sm:$0xf]
      %v144 = vld [vmem:[#allocation9 + $0x3c] sm:$0xf]
      %v161 = vunpack.c.l.b16 %v129
      %v162 = vunpack.c.l.b16 %v130
      %v163 = vunpack.c.l.b16 %v131
      %v164 = vunpack.c.l.b16 %v132
      %v165 = vunpack.c.l.b16 %v133
      %v166 = vunpack.c.l.b16 %v134
      %v167 = vunpack.c.l.b16 %v135
      %v168 = vunpack.c.l.b16 %v136
      %v169 = vunpack.c.l.b16 %v137
      %v170 = vunpack.c.l.b16 %v138
      %v171 = vunpack.c.l.b16 %v139
      %v172 = vunpack.c.l.b16 %v140
      %v173 = vunpack.c.l.b16 %v141
      %v174 = vunpack.c.l.b16 %v142
      %v175 = vunpack.c.l.b16 %v143
      %v176 = vunpack.c.l.b16 %v144
      %v177 = vpack.c.b16 %v162, %v161
      %v178 = vpack.c.b16 %v164, %v163
      %v179 = vpack.c.b16 %v166, %v165
      %v180 = vpack.c.b16 %v168, %v167
      %v181 = vpack.c.b16 %v170, %v169
      %v182 = vpack.c.b16 %v172, %v171
      %v183 = vpack.c.b16 %v174, %v173
      %v184 = vpack.c.b16 %v176, %v175
      %193 = vmatprep.subr.bf16.mxu0 0
      %194 = vmatpush1.bf16.msra.mxu0 %v177
      %195 = vmatprep.subr.bf16.mxu0 0
      %196 = vmatpush1.bf16.msra.mxu0 %v178
      %197 = vmatprep.subr.bf16.mxu0 0
      %198 = vmatpush1.bf16.msra.mxu0 %v179
      %199 = vmatprep.subr.bf16.mxu0 0
      %200 = vmatpush1.bf16.msra.mxu0 %v180
      %201 = vmatprep.subr.bf16.mxu0 0
      %202 = vmatpush1.bf16.msra.mxu0 %v181
      %203 = vmatprep.subr.bf16.mxu0 0
      %204 = vmatpush1.bf16.msra.mxu0 %v182
      %205 = vmatprep.subr.bf16.mxu0 0
      %206 = vmatpush1.bf16.msra.mxu0 %v183
      %207 = vmatprep.subr.bf16.mxu0 0
      %208 = vmatpush1.bf16.msra.mxu0 %v184
      %209 = vmatprep.subr.bf16.mxu0 0
      %210 = vmatpush1.bf16.msra.mxu0 0
      %211 = vmatprep.subr.bf16.mxu0 0
      %212 = vmatpush1.bf16.msra.mxu0 0
      %213 = vmatprep.subr.bf16.mxu0 0
      %214 = vmatpush1.bf16.msra.mxu0 0
      %215 = vmatprep.subr.bf16.mxu0 0
      %216 = vmatpush1.bf16.msra.mxu0 0
      %217 = vmatprep.subr.bf16.mxu0 0
      %218 = vmatpush1.bf16.msra.mxu0 0
      %219 = vmatprep.subr.bf16.mxu0 0
      %220 = vmatpush1.bf16.msra.mxu0 0
      %221 = vmatprep.subr.bf16.mxu0 0
      %222 = vmatpush1.bf16.msra.mxu0 0
      %223 = vmatprep.subr.bf16.mxu0 0
      %224 = vmatpush1.bf16.msra.mxu0 0
      %225 = vmatprep.mubr.bf16.mxu0 0
      %226 = vmatmul.mubr.bf16.gmra.mrb[0].mxu0 %v123
      %v227 = vpop.f32.mrb[0].mxu0
      %v228 = vadd.f32 0.0, %v227
      %v229 = vpop.f32.mrb[0].mxu0
      %v230 = vpop.f32.mrb[0].mxu0
      %v231 = vadd.f32 0.0, %v230
      %v232 = vpop.f32.mrb[0].mxu0
      %233 = vmatprep.mubr.bf16.mxu0 0
      %234 = vmatmul.mubr.bf16.gmra.mrb[0].mxu0 %v124
      %v235 = vpop.f32.mrb[0].mxu0
      %v236 = vadd.f32 0.0, %v235
      %v237 = vpop.f32.mrb[0].mxu0
      %v238 = vpop.f32.mrb[0].mxu0
      %v239 = vadd.f32 0.0, %v238
      %v240 = vpop.f32.mrb[0].mxu0
      %241 = vdwg.mxu0
      %v242 = vadd.f32 %v125, %v228
      %v243 = vadd.f32 %v126, %v231
      %v244 = vadd.f32 %v127, %v236
      %v245 = vadd.f32 %v128, %v239
      %246 = vst [vmem:[#allocation2] sm:$0xff] %v242
      %247 = vst [vmem:[#allocation2 + $0x8] sm:$0xff] %v243
      %248 = vst [vmem:[#allocation2 + $0x10] sm:$0xff] %v244
      %249 = vst [vmem:[#allocation2 + $0x18] sm:$0xff] %v245
    $region53: #{tpu_custom_call.1} parent=1 // pred_fallthru
      _
    // Predicated region
    $region54: #{tpu_custom_call.1} parent=1 // pred_check
      %p250 = pneg %p109
    $region55: #{tpu_custom_call.1} parent=1 // pred_check_branch
      %252 = sbr.rel (%p250) target = $region57
    $region56: #{tpu_custom_call.1} parent=1 // pred_region
      %v253 = vld [vmem:[#allocation11] sm:$0xf]
      %v254 = vld [vmem:[#allocation11 + $0x4] sm:$0xf]
      %v255 = vld [vmem:[#allocation11 + $0x8] sm:$0xf]
      %v256 = vld [vmem:[#allocation11 + $0xc] sm:$0xf]
      %v257 = vld [vmem:[#allocation12] sm:$0xf]
      %v258 = vld [vmem:[#allocation12 + $0x4] sm:$0xf]
      %v259 = vld [vmem:[#allocation12 + $0x8] sm:$0xf]
      %v260 = vld [vmem:[#allocation12 + $0xc] sm:$0xf]
      %v261 = vld [vmem:[#allocation12 + $0x10] sm:$0xf]
      %v262 = vld [vmem:[#allocation12 + $0x14] sm:$0xf]
      %v263 = vld [vmem:[#allocation12 + $0x18] sm:$0xf]
      %v264 = vld [vmem:[#allocation12 + $0x1c] sm:$0xf]
      %v265 = vld [vmem:[#allocation12 + $0x20] sm:$0xf]
      %v266 = vld [vmem:[#allocation12 + $0x24] sm:$0xf]
      %v267 = vld [vmem:[#allocation12 + $0x28] sm:$0xf]
      %v268 = vld [vmem:[#allocation12 + $0x2c] sm:$0xf]
      %v269 = vld [vmem:[#allocation12 + $0x30] sm:$0xf]
      %v270 = vld [vmem:[#allocation12 + $0x34] sm:$0xf]
      %v271 = vld [vmem:[#allocation12 + $0x38] sm:$0xf]
      %v272 = vld [vmem:[#allocation12 + $0x3c] sm:$0xf]
      %v273 = vld [vmem:[#allocation2] sm:$0xff]
      %v274 = vld [vmem:[#allocation2 + $0x8] sm:$0xff]
      %v275 = vld [vmem:[#allocation2 + $0x10] sm:$0xff]
      %v276 = vld [vmem:[#allocation2 + $0x18] sm:$0xff]
      %v277 = vpack.c.bf16 %v274, %v273
      %v278 = vpack.c.bf16 %v276, %v275
      %v279 = vld [vmem:[#allocation14] sm:$0xf]
      %v280 = vld [vmem:[#allocation14 + $0x4] sm:$0xf]
      %v281 = vld [vmem:[#allocation14 + $0x8] sm:$0xf]
      %v282 = vld [vmem:[#allocation14 + $0xc] sm:$0xf]
      %v283 = vld [vmem:[#allocation14 + $0x10] sm:$0xf]
      %v284 = vld [vmem:[#allocation14 + $0x14] sm:$0xf]
      %v285 = vld [vmem:[#allocation14 + $0x18] sm:$0xf]
      %v286 = vld [vmem:[#allocation14 + $0x1c] sm:$0xf]
      %v287 = vld [vmem:[#allocation14 + $0x20] sm:$0xf]
      %v288 = vld [vmem:[#allocation14 + $0x24] sm:$0xf]
      %v289 = vld [vmem:[#allocation14 + $0x28] sm:$0xf]
      %v290 = vld [vmem:[#allocation14 + $0x2c] sm:$0xf]
      %v291 = vld [vmem:[#allocation14 + $0x30] sm:$0xf]
      %v292 = vld [vmem:[#allocation14 + $0x34] sm:$0xf]
      %v293 = vld [vmem:[#allocation14 + $0x38] sm:$0xf]
      %v294 = vld [vmem:[#allocation14 + $0x3c] sm:$0xf]
      %v311 = vunpack.c.l.b16 %v279
      %v312 = vunpack.c.l.b16 %v280
      %v313 = vunpack.c.l.b16 %v281
      %v314 = vunpack.c.l.b16 %v282
      %v315 = vunpack.c.l.b16 %v283
      %v316 = vunpack.c.l.b16 %v284
      %v317 = vunpack.c.l.b16 %v285
      %v318 = vunpack.c.l.b16 %v286
      %v319 = vunpack.c.l.b16 %v287
      %v320 = vunpack.c.l.b16 %v288
      %v321 = vunpack.c.l.b16 %v289
      %v322 = vunpack.c.l.b16 %v290
      %v323 = vunpack.c.l.b16 %v291
      %v324 = vunpack.c.l.b16 %v292
      %v325 = vunpack.c.l.b16 %v293
      %v326 = vunpack.c.l.b16 %v294
      %v327 = vpack.c.b16 %v312, %v311
      %v328 = vpack.c.b16 %v314, %v313
      %v329 = vpack.c.b16 %v316, %v315
      %v330 = vpack.c.b16 %v318, %v317
      %v331 = vpack.c.b16 %v320, %v319
      %v332 = vpack.c.b16 %v322, %v321
      %v333 = vpack.c.b16 %v324, %v323
      %v334 = vpack.c.b16 %v326, %v325
      %343 = vmatprep.subr.bf16.mxu0 0
      %344 = vmatpush1.bf16.msra.mxu0 %v327
      %345 = vmatprep.subr.bf16.mxu0 0
      %346 = vmatpush1.bf16.msra.mxu0 %v328
      %347 = vmatprep.subr.bf16.mxu0 0
      %348 = vmatpush1.bf16.msra.mxu0 %v329
      %349 = vmatprep.subr.bf16.mxu0 0
      %350 = vmatpush1.bf16.msra.mxu0 %v330
      %351 = vmatprep.subr.bf16.mxu0 0
      %352 = vmatpush1.bf16.msra.mxu0 %v331
      %353 = vmatprep.subr.bf16.mxu0 0
      %354 = vmatpush1.bf16.msra.mxu0 %v332
      %355 = vmatprep.subr.bf16.mxu0 0
      %356 = vmatpush1.bf16.msra.mxu0 %v333
      %357 = vmatprep.subr.bf16.mxu0 0
      %358 = vmatpush1.bf16.msra.mxu0 %v334
      %359 = vmatprep.subr.bf16.mxu0 0
      %360 = vmatpush1.bf16.msra.mxu0 0
      %361 = vmatprep.subr.bf16.mxu0 0
      %362 = vmatpush1.bf16.msra.mxu0 0
      %363 = vmatprep.subr.bf16.mxu0 0
      %364 = vmatpush1.bf16.msra.mxu0 0
      %365 = vmatprep.subr.bf16.mxu0 0
      %366 = vmatpush1.bf16.msra.mxu0 0
      %367 = vmatprep.subr.bf16.mxu0 0
      %368 = vmatpush1.bf16.msra.mxu0 0
      %369 = vmatprep.subr.bf16.mxu0 0
      %370 = vmatpush1.bf16.msra.mxu0 0
      %371 = vmatprep.subr.bf16.mxu0 0
      %372 = vmatpush1.bf16.msra.mxu0 0
      %373 = vmatprep.subr.bf16.mxu0 0
      %374 = vmatpush1.bf16.msra.mxu0 0
      %375 = vmatprep.mubr.bf16.mxu0 0
      %376 = vmatmul.mubr.bf16.gmra.mrb[0].mxu0 %v277
      %v377 = vpop.f32.mrb[0].mxu0
      %v378 = vadd.f32 0.0, %v377
      %v379 = vpop.f32.mrb[0].mxu0
      %v380 = vpop.f32.mrb[0].mxu0
      %v381 = vadd.f32 0.0, %v380
      %v382 = vpop.f32.mrb[0].mxu0
      %383 = vmatprep.mubr.bf16.mxu0 0
      %384 = vmatmul.mubr.bf16.gmra.mrb[0].mxu0 %v278
      %v385 = vpop.f32.mrb[0].mxu0
      %v386 = vadd.f32 0.0, %v385
      %v387 = vpop.f32.mrb[0].mxu0
      %v388 = vpop.f32.mrb[0].mxu0
      %v389 = vadd.f32 0.0, %v388
      %v390 = vpop.f32.mrb[0].mxu0
      %391 = vdwg.mxu0
      %v396 = vunpack.c.l.b16 %v253
      %v397 = vunpack.c.l.b16 %v254
      %v398 = vunpack.c.l.b16 %v255
      %v399 = vunpack.c.l.b16 %v256
      %v400 = vpack.c.b16 %v397, %v396
      %v401 = vpack.c.b16 %v399, %v398
      %v420 = vunpack.c.l.b16 %v257
      %v421 = vunpack.c.l.b16 %v258
      %v422 = vunpack.c.l.b16 %v259
      %v423 = vunpack.c.l.b16 %v260
      %v424 = vunpack.c.l.b16 %v261
      %v425 = vunpack.c.l.b16 %v262
      %v426 = vunpack.c.l.b16 %v263
      %v427 = vunpack.c.l.b16 %v264
      %v428 = vunpack.c.l.b16 %v265
      %v429 = vunpack.c.l.b16 %v266
      %v430 = vunpack.c.l.b16 %v267
      %v431 = vunpack.c.l.b16 %v268
      %v432 = vunpack.c.l.b16 %v269
      %v433 = vunpack.c.l.b16 %v270
      %v434 = vunpack.c.l.b16 %v271
      %v435 = vunpack.c.l.b16 %v272
      %v436 = vpack.c.b16 %v421, %v420
      %v437 = vpack.c.b16 %v423, %v422
      %v438 = vpack.c.b16 %v425, %v424
      %v439 = vpack.c.b16 %v427, %v426
      %v440 = vpack.c.b16 %v429, %v428
      %v441 = vpack.c.b16 %v431, %v430
      %v442 = vpack.c.b16 %v433, %v432
      %v443 = vpack.c.b16 %v435, %v434
      %452 = vmatprep.subr.bf16.mxu0 0
      %453 = vmatpush1.bf16.msra.mxu0 %v436
      %454 = vmatprep.subr.bf16.mxu0 0
      %455 = vmatpush1.bf16.msra.mxu0 %v437
      %456 = vmatprep.subr.bf16.mxu0 0
      %457 = vmatpush1.bf16.msra.mxu0 %v438
      %458 = vmatprep.subr.bf16.mxu0 0
      %459 = vmatpush1.bf16.msra.mxu0 %v439
      %460 = vmatprep.subr.bf16.mxu0 0
      %461 = vmatpush1.bf16.msra.mxu0 %v440
      %462 = vmatprep.subr.bf16.mxu0 0
      %463 = vmatpush1.bf16.msra.mxu0 %v441
      %464 = vmatprep.subr.bf16.mxu0 0
      %465 = vmatpush1.bf16.msra.mxu0 %v442
      %466 = vmatprep.subr.bf16.mxu0 0
      %467 = vmatpush1.bf16.msra.mxu0 %v443
      %468 = vmatprep.subr.bf16.mxu0 0
      %469 = vmatpush1.bf16.msra.mxu0 0
      %470 = vmatprep.subr.bf16.mxu0 0
      %471 = vmatpush1.bf16.msra.mxu0 0
      %472 = vmatprep.subr.bf16.mxu0 0
      %473 = vmatpush1.bf16.msra.mxu0 0
      %474 = vmatprep.subr.bf16.mxu0 0
      %475 = vmatpush1.bf16.msra.mxu0 0
      %476 = vmatprep.subr.bf16.mxu0 0
      %477 = vmatpush1.bf16.msra.mxu0 0
      %478 = vmatprep.subr.bf16.mxu0 0
      %479 = vmatpush1.bf16.msra.mxu0 0
      %480 = vmatprep.subr.bf16.mxu0 0
      %481 = vmatpush1.bf16.msra.mxu0 0
      %482 = vmatprep.subr.bf16.mxu0 0
      %483 = vmatpush1.bf16.msra.mxu0 0
      %484 = vmatprep.mubr.bf16.mxu0 0
      %485 = vmatmul.mubr.bf16.gmra.mrb[0].mxu0 %v400
      %v486 = vpop.f32.mrb[0].mxu0
      %v487 = vadd.f32 %v378, %v486
      %v488 = vpop.f32.mrb[0].mxu0
      %v489 = vpop.f32.mrb[0].mxu0
      %v490 = vadd.f32 %v381, %v489
      %v491 = vpop.f32.mrb[0].mxu0
      %492 = vmatprep.mubr.bf16.mxu0 0
      %493 = vmatmul.mubr.bf16.gmra.mrb[0].mxu0 %v401
      %v494 = vpop.f32.mrb[0].mxu0
      %v495 = vadd.f32 %v386, %v494
      %v496 = vpop.f32.mrb[0].mxu0
      %v497 = vpop.f32.mrb[0].mxu0
      %v498 = vadd.f32 %v389, %v497
      %v499 = vpop.f32.mrb[0].mxu0
      %500 = vdwg.mxu0
      %v501 = vld [vmem:[%s7] sm:$0x1]
      %v503 = vlaneseq
      %v504 = vshrl.u32 %v503, 7
      %v505 = vsub.s32 0, %v504
      %v506 = vrot.slane %v501, %v505
      %v508 = vadd.f32 %v487, %v506
      %v509 = vadd.f32 %v490, %v506
      %v510 = vadd.f32 %v495, %v506
      %v511 = vadd.f32 %v498, %v506
      %v512 = vmax.f32 %v508, 0.0
      %v513 = vmax.f32 %v509, 0.0
      %v514 = vmax.f32 %v510, 0.0
      %v515 = vmax.f32 %v511, 0.0
      %v516 = vpack.c.bf16 %v513, %v512
      %v517 = vpack.c.bf16 %v515, %v514
      %v520 = vunpack.c.l.b16 %v516
      %v521 = vunpack.c.h.b16 %v516
      %v522 = vunpack.c.l.b16 %v517
      %v523 = vunpack.c.h.b16 %v517
      %v524 = vpack.c.b16 %v520, %v520
      %v525 = vpack.c.b16 %v521, %v521
      %v526 = vpack.c.b16 %v522, %v522
      %v527 = vpack.c.b16 %v523, %v523
      %532 = vst [vmem:[#allocation15] sm:$0xf] %v524
      %533 = vst [vmem:[#allocation15 + $0x4] sm:$0xf] %v525
      %534 = vst [vmem:[#allocation15 + $0x8] sm:$0xf] %v526
      %535 = vst [vmem:[#allocation15 + $0xc] sm:$0xf] %v527
    $region57: #{tpu_custom_call.1} parent=1 // pred_fallthru
      _
    // Predicated region
    $region58: #{tpu_custom_call.1} parent=1 // pred_check
      _
    $region59: #{tpu_custom_call.1} parent=1 // pred_check_branch
      %537 = sbr.rel (0) target = $region61
    $region60: #{tpu_custom_call.1} parent=1 // pred_region
      %s539 = ssub.s32 256, 256
      %540 = vsyncadd [#allocation8], %s539
      %s541 = sshll.u32 [#allocation15], 4
      %s542 = int_to_ptr.vmem [resolvable:$true] %s541
      %547 = dma.vmem_to_hbm [thread:$0]  %s542, 256, %s8, [#allocation8], 64, 64, 4
    $region61: #{tpu_custom_call.1} parent=1 // pred_fallthru
      _
    // Predicated region
    $region62: #{tpu_custom_call.1} parent=1 // pred_check
      _
    $region63: #{tpu_custom_call.1} parent=1 // pred_check_branch
      %549 = sbr.rel (0) target = $region65
    $region64: #{tpu_custom_call.1} parent=1 // pred_region
      %550 = dma.done [#allocation8], 256
    $region65: #{tpu_custom_call.1} parent=1 // pred_fallthru
      _
    %551 = vsyncpa [#allocation7], 1
    %552 = vsyncpa [#allocation10], 1
    %553 = vsyncpa [#allocation13], 1
    %554 = vsyncpa [#allocation8], 1

</llo_original>
